<compile_context>
chip_gen: v6e
topology: v6e:2x2x1
jax: 0.10.0
libtpu: 0.0.40
codegen_flags: <defaults>
</compile_context>

<pallas_src>
from functools import partial

import jax
import jax.numpy as jnp
from jax import lax
from jax.experimental import pallas as pl
from jax.experimental.pallas import tpu as pltpu

K = 15              # conv16 kernel size
PAD = 7             # conv16 padding (SAME for stride 1)
STEM_KPAD = 16      # stem contraction padded 15 -> 16 (full bf16 sublane tile)
HEAD_MPAD = 8       # head matmul M padded 1 -> 8 (full sublane tile)
NEG_SLOPE = 0.01    # nn.LeakyReLU default negative slope
EPS = 1e-5          # nn.BatchNorm1d default eps
LANE = 128          # TPU lane width


def _lrelu(v):
    return jnp.where(v >= 0, v, NEG_SLOPE * v)


# ---------------------------------------------------------------------------
# pltpu.roll direction probe (expected to match jnp.roll: out[j] = x[j - shift]).
# Run once, eagerly, before the main kernel is traced.
# ---------------------------------------------------------------------------
_ROLL_SIGN = None


def _get_roll_sign():
    global _ROLL_SIGN
    if _ROLL_SIGN is None:
        def kern(x_ref, o_ref):
            o_ref[...] = pltpu.roll(x_ref[...], shift=1, axis=1)

        x = jnp.tile(jnp.arange(128, dtype=jnp.float32)[None, :], (8, 1))
        out = pl.pallas_call(
            kern, out_shape=jax.ShapeDtypeStruct((8, 128), jnp.float32))(x)
        # jnp.roll convention puts x[:, -1] == 127 at column 0.
        _ROLL_SIGN = -1 if int(out[0, 0]) == 1 else 1
    return _ROLL_SIGN


# ---------------------------------------------------------------------------
# In-kernel im2col helper: K lane-shifted copies of h into a persistent VMEM slab.
# ---------------------------------------------------------------------------
def _fill_slab(h, slab_ref, roll_sign):
    """Write the K shifted copies of h (C_in, L) into slab_ref ((K*C_in, L)).

    Row block k of the slab holds h[:, j + k - PAD] at column j (zero outside the
    valid range), i.e. a logical jnp.roll by (PAD - k) with wrapped lanes masked.
    The shift runs on the XLU via pltpu.roll; stores use aligned static offsets.
    """
    c_in, l = h.shape
    col = lax.broadcasted_iota(jnp.int32, (c_in, l), 1)
    for k in range(K):
        s = PAD - k                                   # logical (jnp.roll-style) shift
        r = h if s == 0 else pltpu.roll(h, shift=(roll_sign * s) % l, axis=1)
        lo, hi = max(0, s), l + min(0, s)
        if lo > 0 or hi < l:                          # zero the circular wrap-around
            r = jnp.where((col >= lo) & (col < hi), r, 0.0)
        slab_ref[k * c_in:(k + 1) * c_in, :] = r.astype(slab_ref.dtype)


# ---------------------------------------------------------------------------
# Fused kernel: one grid step = one residual block of one sample; stem / head are
# folded into the first / last block step via pl.when.
# ---------------------------------------------------------------------------
def _fused_kernel(x_ref, wstem_ref, bstem_ref, w1_ref, w2_ref, s_ref, bvec_ref,
                  whead_ref, bhead_ref, o_ref, act_ref, slab_ref, *, roll_sign):
    bidx = pl.program_id(1)
    c, l = act_ref.shape

    # ---- stem: conv16(1 -> C) + folded BN + LeakyReLU (first block step only) ----
    @pl.when(bidx == 0)
    def _():
        x = x_ref[0].astype(jnp.float32)                       # (1, L)
        total = ((l + 2 * PAD + LANE - 1) // LANE) * LANE      # lane-aligned pad buf
        xp = jnp.concatenate(
            [jnp.zeros((1, PAD), x.dtype), x,
             jnp.zeros((1, total - l - PAD), x.dtype)], axis=1)
        rows = [xp[:, k:k + l] for k in range(K)]              # tiny (1, L) slices
        rows.append(jnp.zeros_like(x))                         # pad contraction -> 16
        slab0 = jnp.concatenate(rows, axis=0).astype(wstem_ref.dtype)   # (16, L)
        h0 = jnp.dot(wstem_ref[...], slab0, preferred_element_type=jnp.float32)
        act_ref[...] = _lrelu(h0 + jnp.broadcast_to(bstem_ref[...], (c, l)))

    # ---- residual block: bn->lrelu->conv1->bn->lrelu->conv2->bn->(+x)->lrelu ----
    # Post-conv BNs are folded into w1/w2 (output-channel scale) + bias; only the
    # shared BN affine (scale, bias) is applied explicitly.
    xin = act_ref[...]                                          # (C, L) f32, resident
    scale = jnp.broadcast_to(s_ref[0], (c, l))                  # hoisted broadcasts
    bias = jnp.broadcast_to(bvec_ref[0], (c, l))

    h = _lrelu(scale * xin + bias)                              # bn + lrelu on input
    _fill_slab(h, slab_ref, roll_sign)
    h = _lrelu(jnp.dot(w1_ref[0], slab_ref[...],
                       preferred_element_type=jnp.float32) + bias)
    _fill_slab(h, slab_ref, roll_sign)
    h = jnp.dot(w2_ref[0], slab_ref[...],
                preferred_element_type=jnp.float32) + bias
    hout = _lrelu(h + xin)                                      # residual + lrelu
    act_ref[...] = hout

    # ---- head: conv16(C -> 1) + folded BN + LeakyReLU (last block step only) ----
    @pl.when(bidx == pl.num_programs(1) - 1)
    def _():
        _fill_slab(hout, slab_ref, roll_sign)
        oh = jnp.dot(whead_ref[...], slab_ref[...],
                     preferred_element_type=jnp.float32)        # (8, L); rows 1..7 = 0
        o_ref[0] = _lrelu(
            oh[0:1, :] + jnp.broadcast_to(bhead_ref[...], (1, l))).astype(o_ref.dtype)


# ---------------------------------------------------------------------------
# JAX-side parameter preparation (BN folding, im2col weight layout, stacking).
# ---------------------------------------------------------------------------
def _fold_bn(gamma, beta, mean, var):
    """Eval-mode BatchNorm1d -> per-channel affine (scale, bias)."""
    scale = gamma * lax.rsqrt(var + EPS)
    return scale, beta - mean * scale


def _im2col_weights(w, scale):
    """PyTorch (C_out, C_in, K) conv weights -> f32 (C_out, K*C_in) im2col layout with
    the following BatchNorm's scale folded into the output channels.  Column
    k*C_in + ci corresponds to tap k / input channel ci (matches _fill_slab rows)."""
    c_out, c_in, k = w.shape
    wf = (w * scale[:, None, None]).astype(jnp.float32)
    return jnp.transpose(wf, (0, 2, 1)).reshape(c_out, k * c_in)


def _stack_block_params(stage_params, matmul_dtype):
    w1s, w2s, ss, bs = [], [], [], []
    for stage in stage_params:
        for w1, w2, bn in stage:
            scale, bias = _fold_bn(*bn)
            w1s.append(_im2col_weights(w1, scale).astype(matmul_dtype))
            w2s.append(_im2col_weights(w2, scale).astype(matmul_dtype))
            ss.append(scale.reshape(-1, 1).astype(jnp.float32))
            bs.append(bias.reshape(-1, 1).astype(jnp.float32))
    return jnp.stack(w1s), jnp.stack(w2s), jnp.stack(ss), jnp.stack(bs)


@partial(jax.jit, static_argnames=("roll_sign",))
def _fused_forward(x, wstem, bstem, w1_all, w2_all, s_all, b_all, whead, bhead,
                   *, roll_sign):
    n, _, l = x.shape
    nb, c, kc = w1_all.shape
    slab_dtype = w1_all.dtype
    kernel = partial(_fused_kernel, roll_sign=roll_sign)
    return pl.pallas_call(
        kernel,
        out_shape=jax.ShapeDtypeStruct((n, 1, l), x.dtype),
        grid_spec=pltpu.PrefetchScalarGridSpec(
            num_scalar_prefetch=0,
            grid=(n, nb),
            in_specs=[
                pl.BlockSpec((1, 1, l), lambda i, b: (i, 0, 0)),      # x
                pl.BlockSpec((c, STEM_KPAD), lambda i, b: (0, 0)),    # stem weights
                pl.BlockSpec((c, 1), lambda i, b: (0, 0)),            # stem bias
                pl.BlockSpec((1, c, kc), lambda i, b: (b, 0, 0)),     # W1[b] (streamed)
                pl.BlockSpec((1, c, kc), lambda i, b: (b, 0, 0)),     # W2[b] (streamed)
                pl.BlockSpec((1, c, 1), lambda i, b: (b, 0, 0)),      # BN scale[b]
                pl.BlockSpec((1, c, 1), lambda i, b: (b, 0, 0)),      # BN bias[b]
                pl.BlockSpec((HEAD_MPAD, kc), lambda i, b: (0, 0)),   # head weights
                pl.BlockSpec((1, 1), lambda i, b: (0, 0)),            # head bias
            ],
            out_specs=pl.BlockSpec((1, 1, l), lambda i, b: (i, 0, 0)),
            scratch_shapes=[
                pltpu.VMEM((c, l), jnp.float32),        # resident (C, L) activation
                pltpu.VMEM((K * c, l), slab_dtype),     # shared im2col slab
            ],
        ),
        compiler_params=pltpu.CompilerParams(
            dimension_semantics=("parallel", "arbitrary"),
            vmem_limit_bytes=48 * 1024 * 1024,
        ),
    )(x, wstem, bstem, w1_all, w2_all, s_all, b_all, whead, bhead)


def resnet_forward(x, stem_w, stem_bn, stage_params, head_w, head_bn,
                   matmul_dtype=jnp.bfloat16):
    """Eval-mode ResNet.forward as a single fused Pallas kernel.

    x: (N, 1, L) with L a multiple of 128.  stem_w: (C, 1, K).  head_w: (1, C, K).
    *_bn = (gamma, beta, mean, var).  stage_params: the 4 stages used by forward()
    (layer1..layer4); each stage is a list of blocks; each block is
    (w1, w2, (gamma, beta, mean, var)).  Call this wrapper outside jit.
    """
    roll_sign = _get_roll_sign()
    c = stem_w.shape[0]
    stem_scale, stem_bias = _fold_bn(*stem_bn)
    head_scale, head_bias = _fold_bn(*head_bn)
    wstem = jnp.pad(_im2col_weights(stem_w, stem_scale),
                    ((0, 0), (0, STEM_KPAD - K))).astype(matmul_dtype)       # (C, 16)
    bstem = stem_bias.reshape(c, 1).astype(jnp.float32)
    whead = jnp.pad(_im2col_weights(head_w, head_scale),
                    ((0, HEAD_MPAD - 1), (0, 0))).astype(matmul_dtype)       # (8, K*C)
    bhead = head_bias.reshape(1, 1).astype(jnp.float32)
    w1_all, w2_all, s_all, b_all = _stack_block_params(stage_params, matmul_dtype)
    return _fused_forward(x, wstem, bstem, w1_all, w2_all, s_all, b_all, whead, bhead,
                          roll_sign=roll_sign)


# ---------------------------------------------------------------------------
# Pure-JAX reference (mirrors the PyTorch forward, eval-mode BN, f32).
# ---------------------------------------------------------------------------
def _conv_ref(t, w):
    return lax.conv_general_dilated(
        t, w, window_strides=(1,), padding=((PAD, PAD),),
        dimension_numbers=("NCH", "OIH", "NCH"))


def _bn_ref(t, gamma, beta, mean, var):
    return ((t - mean[None, :, None]) * lax.rsqrt(var[None, :, None] + EPS)
            * gamma[None, :, None] + beta[None, :, None])


def _block_ref(x, w1, w2, bn):
    bnf = lambda t: _bn_ref(t, *bn)
    out = _lrelu(bnf(x))
    out = _conv_ref(out, w1)
    out = _lrelu(bnf(out))
    out = _conv_ref(out, w2)
    out = bnf(out)
    return _lrelu(out + x)


def resnet_reference(x, stem_w, stem_bn, stage_params, head_w, head_bn):
    h = _lrelu(_bn_ref(_conv_ref(x, stem_w), *stem_bn))
    for stage in stage_params:
        for w1, w2, bn in stage:
            h = _block_ref(h, w1, w2, bn)
    return _lrelu(_bn_ref(_conv_ref(h, head_w), *head_bn))


# ---------------------------------------------------------------------------
# Self-test.
# ---------------------------------------------------------------------------
if __name__ == "__main__":
    N, C, L = 2, 256, 256       # the module hard-codes channels=256; small N / L
    BLOCKS_PER_STAGE = 1        # `layers` constructor arg; forward uses layer1..layer4

    key = jax.random.PRNGKey(0)

    def bn_params(k, c):
        k1, k2, k3, k4 = jax.random.split(k, 4)
        return (1.0 + 0.1 * jax.random.normal(k1, (c,), jnp.float32),
                0.1 * jax.random.normal(k2, (c,), jnp.float32),
                0.1 * jax.random.normal(k3, (c,), jnp.float32),
                1.0 + 0.1 * jax.random.uniform(k4, (c,), jnp.float32))

    key, kx = jax.random.split(key)
    x = jax.random.normal(kx, (N, 1, L), jnp.float32)

    key, k1, k2 = jax.random.split(key, 3)
    stem_w = jax.random.normal(k1, (C, 1, K), jnp.float32) / jnp.sqrt(1.0 * K)
    stem_bn = bn_params(k2, C)

    stage_params = []
    for _ in range(4):          # layer1..layer4 (layer5 exists but is unused)
        blocks = []
        for _ in range(BLOCKS_PER_STAGE):
            key, kw1, kw2, kbn = jax.random.split(key, 4)
            w1 = jax.random.normal(kw1, (C, C, K), jnp.float32) / jnp.sqrt(1.0 * K * C)
            w2 = jax.random.normal(kw2, (C, C, K), jnp.float32) / jnp.sqrt(1.0 * K * C)
            blocks.append((w1, w2, bn_params(kbn, C)))
        stage_params.append(blocks)

    key, k3, k4 = jax.random.split(key, 3)
    head_w = jax.random.normal(k3, (1, C, K), jnp.float32) / jnp.sqrt(1.0 * K * C)
    head_bn = bn_params(k4, 1)

    ref = resnet_reference(x, stem_w, stem_bn, stage_params, head_w, head_bn)

    # f32 MXU path: same math as the reference -> tight tolerance.
    out_f32 = resnet_forward(x, stem_w, stem_bn, stage_params, head_w, head_bn,
                             matmul_dtype=jnp.float32)
    out_f32 = jax.block_until_ready(out_f32)
    assert out_f32.shape == (N, 1, L) and out_f32.dtype == jnp.float32
    max_err = float(jnp.max(jnp.abs(out_f32 - ref)))
    assert jnp.allclose(out_f32, ref, atol=2e-3, rtol=2e-3), \
        f"f32 max abs err {max_err}"

    # bf16 default path (native MXU dtype on v5e/v6e/v7x): loose end-to-end check.
    out = resnet_forward(x, stem_w, stem_bn, stage_params, head_w, head_bn)
    out = jax.block_until_ready(out)
    assert out.shape == (N, 1, L) and out.dtype == jnp.float32
    assert bool(jnp.all(jnp.isfinite(out)))
    rel = float(jnp.linalg.norm(out - ref) / (jnp.linalg.norm(ref) + 1e-12))
    assert rel < 0.15, f"bf16 relative L2 error {rel}"

    print("KERNEL_OK")
</pallas_src>

<mosaic_0001>
module attributes {stable_mosaic.version = 11 : i64} {
  func.func @kern(%arg0: memref<8x128xf32, #tpu.memory_space<vmem>>, %arg1: memref<8x128xf32, #tpu.memory_space<vmem>>) attributes {dimension_semantics = [], scalar_prefetch = 0 : i64, scratch_operands = 0 : i64, tpu.core_type = #tpu.core_type<tc>} {
    %c0 = arith.constant 0 : index
    %c0_0 = arith.constant 0 : index
    %0 = vector.load %arg0[%c0, %c0_0] : memref<8x128xf32, #tpu.memory_space<vmem>>, vector<8x128xf32>
    %c1_i32 = arith.constant 1 : i32
    %1 = tpu.dynamic_rotate %0 by %c1_i32 dim 1 : vector<8x128xf32>, i32 -> vector<8x128xf32>
    %c0_1 = arith.constant 0 : index
    %c0_2 = arith.constant 0 : index
    %2 = vector.load %arg1[%c0_1, %c0_2] : memref<8x128xf32, #tpu.memory_space<vmem>>, vector<8x128xf32>
    tpu.vector_store %arg1[%c0_1, %c0_2], %1 {strides = array<i32>} : memref<8x128xf32, #tpu.memory_space<vmem>>, vector<8x128xf32>,
    return
  }
}

</mosaic_0001>

<llo_original>
// kernel: tpu_custom_call.1
$region0: #{tpu_custom_call.1}
  #allocation0 [shape = 'u32[]', space=smem, size = 0x4, offset = 0x4, fixed_abs, tag = 'smem constant byte address 0x4 - core index']
  #allocation1 [shape = 'u32[144,128]{1,0:T(1,128)}', space=vmem, size = 0x12000, scoped, tag = 'internal scratch']
  %s0 = inlined_call_operand.hbm [shape: f32[8,128], index: 0, kind: input, shape index: {}]
  %s1 = inlined_call_operand.hbm [shape: f32[8,128], index: 1, kind: output, shape index: {}]
  %s2 = sld [smem:[#allocation0]]
  $region18: #{tpu_custom_call.1} parent=0
    _
  %s4 = ssub.s32 1, %s2
  %s5 = scalar_select 0, %s4, %s2
  $region1: #{tpu_custom_call.1} parent=0
    #allocation2 [shape = 'u8[4096]{0}', space=vmem, size = 0x1000, scoped, tag = 'input window, operand 0, single buffered']
    #allocation3 [shape = 's32[1]{0}', space=sflag, size = 0x4, scoped, tag = 'scoped memory for tpu_custom_call.1']
    #allocation4 [shape = 's32[1]{0}', space=sflag, size = 0x4, scoped, tag = 'scoped memory for tpu_custom_call.1']
    #allocation5 [shape = 'u8[4096]{0}', space=vmem, size = 0x1000, scoped, tag = 'output window, operand 0, single buffered']
    %6 = vsyncpa [#allocation3], 0
    %7 = vsyncpa [#allocation4], 0
    // Predicated region
    $region2: #{tpu_custom_call.1} parent=1 // pred_check
      _
    $region3: #{tpu_custom_call.1} parent=1 // pred_check_branch
      %9 = sbr.rel (0) target = $region5
    $region4: #{tpu_custom_call.1} parent=1 // pred_region
      %s11 = ssub.s32 128, 128
      %12 = vsyncadd [#allocation3], %s11
      %s14 = sshll.u32 [#allocation2], 4
      %s15 = int_to_ptr.vmem [resolvable:$true] %s14
      %17 = dma.hbm_to_vmem [thread:$0]  %s0, 128, %s15, [#allocation3]
    $region5: #{tpu_custom_call.1} parent=1 // pred_fallthru
      _
    // Predicated region
    $region6: #{tpu_custom_call.1} parent=1 // pred_check
      _
    $region7: #{tpu_custom_call.1} parent=1 // pred_check_branch
      %19 = sbr.rel (0) target = $region9
    $region8: #{tpu_custom_call.1} parent=1 // pred_region
      %20 = dma.done [#allocation3], 128
    $region9: #{tpu_custom_call.1} parent=1 // pred_fallthru
      _
    %v21 = vld [vmem:[#allocation2] sm:$0xff]
    %22 = vrot.lane.b32.xlu0 %v21, 1
    %v23 = vpop.permute.xlu0 %22
    %24 = vst [vmem:[#allocation5] sm:$0xff] %v23
    // Predicated region
    $region10: #{tpu_custom_call.1} parent=1 // pred_check
      _
    $region11: #{tpu_custom_call.1} parent=1 // pred_check_branch
      %26 = sbr.rel (0) target = $region13
    $region12: #{tpu_custom_call.1} parent=1 // pred_region
      %s28 = ssub.s32 128, 128
      %29 = vsyncadd [#allocation4], %s28
      %s31 = sshll.u32 [#allocation5], 4
      %s32 = int_to_ptr.vmem [resolvable:$true] %s31
      %34 = dma.vmem_to_hbm [thread:$0]  %s32, 128, %s1, [#allocation4]
    $region13: #{tpu_custom_call.1} parent=1 // pred_fallthru
      _
    // Predicated region
    $region14: #{tpu_custom_call.1} parent=1 // pred_check
      _
    $region15: #{tpu_custom_call.1} parent=1 // pred_check_branch
      %36 = sbr.rel (0) target = $region17
    $region16: #{tpu_custom_call.1} parent=1 // pred_region
      %37 = dma.done [#allocation4], 128
    $region17: #{tpu_custom_call.1} parent=1 // pred_fallthru
      _
    %38 = vsyncpa [#allocation3], 1
    %39 = vsyncpa [#allocation4], 1

</llo_original>
